<compile_context>
chip_gen: v6e
topology: v6e:2x2x1
jax: 0.10.0
libtpu: 0.0.40
codegen_flags: <defaults>
</compile_context>

<pallas_src>
import functools
import math

import jax
import jax.numpy as jnp
from jax import lax
from jax.experimental import pallas as pl
from jax.experimental.pallas import tpu as pltpu


# ----------------------------------------------------------------------------
# Fused forward kernel over tiles of N rows.
# ----------------------------------------------------------------------------
def _fused_forward_kernel(up_ref, upb_ref, mask_ref, atoms_ref, bias_ref,
                          out_ref, *, d_model, n_features, use_bf16, norm_eps):
    D, F = d_model, n_features

    # --- precode_biases = |upb| * mask, L2-row-normalized --------------------
    # Tiny (F, F) elementwise + row reduce, recomputed per tile (negligible vs.
    # the MXU work; keeps everything in one pallas_call and correct under
    # megacore "parallel" sharding).  rsqrt goes to the EUP slot.
    unnormed = jnp.abs(upb_ref[...]) * mask_ref[...]
    sumsq = jnp.sum(unnormed * unnormed, axis=-1, keepdims=True)
    # NOTE: with norm_eps=0 an all-zero row yields NaN, matching PyTorch.
    pb = unnormed * lax.rsqrt(sumsq + norm_eps)                       # (F, F)

    # --- forward hot path (two MXU matmuls) ----------------------------------
    precodes = jnp.abs(up_ref[...])                                   # (tn, F)
    atoms = atoms_ref[...]                                            # (F, D)
    if use_bf16:
        codes = precodes + jnp.dot(precodes.astype(jnp.bfloat16),
                                   pb.astype(jnp.bfloat16),
                                   preferred_element_type=jnp.float32)
        pred = jnp.dot(codes.astype(jnp.bfloat16),
                       atoms.astype(jnp.bfloat16),
                       preferred_element_type=jnp.float32) + bias_ref[...]
    else:
        codes = precodes + jnp.dot(precodes, pb,
                                   preferred_element_type=jnp.float32)
        pred = jnp.dot(codes, atoms,
                       preferred_element_type=jnp.float32) + bias_ref[...]

    out_dtype = out_ref.dtype
    if D % 128 == 0 and F % 128 == 0:
        # 128-aligned segment boundaries: two direct unmasked full-width
        # stores, no cross-lane packing and no (tn, W) concat temp.
        out_ref[:, :D] = pred.astype(out_dtype)
        out_ref[:, D:D + F] = codes.astype(out_dtype)
    else:
        # Single lane-dense packed store: [pred | codes | 0-pad to x128].
        parts = [pred.astype(out_dtype), codes.astype(out_dtype)]
        pad = out_ref.shape[-1] - (D + F)
        if pad > 0:
            parts.append(jnp.zeros((pred.shape[0], pad), out_dtype))
        out_ref[...] = jnp.concatenate(parts, axis=-1)


# ----------------------------------------------------------------------------
# Wrapper: tiling, minimal padding, output unpacking.
# ----------------------------------------------------------------------------
def sparse_nnmf_forward(unsigned_precodes, unsigned_precode_biases,
                        precode_biases_mask, atoms, bias=None, *,
                        tn=2048, use_bf16=False, out_dtype=jnp.float32,
                        norm_eps=0.0):
    """Returns (pred, codes, precodes), matching the PyTorch forward()."""
    N, F = unsigned_precodes.shape
    Fa, D = atoms.shape
    assert Fa == F

    # precodes is just |unsigned_precodes|: compute it outside the kernel (XLA
    # fuses it for free) instead of spending kernel HBM writeback on it.
    precodes_out = jnp.abs(unsigned_precodes)

    # Packed kernel output width: [pred(D) | codes(F)], padded to x128 lanes.
    W = D + F
    W_pad = -(-W // 128) * 128

    # Pad rows only to a multiple of 8 (<= 7 rows); the last grid tile may be
    # ragged -- Pallas masks OOB reads/writes and rows are independent.
    n8 = -(-N // 8) * 8
    up = unsigned_precodes.astype(jnp.float32)
    if n8 != N:
        up = jnp.pad(up, ((0, n8 - N), (0, 0)))

    # Row tile: as large as possible (amortize per-step overhead), but keep
    # >= 4 grid steps (>= 2 per TensorCore on 2-TC chips) once each step would
    # still carry >= 512 rows, so megacore sharding engages.
    tn_eff = min(tn, n8)
    if n8 >= 4 * 512:
        tn_eff = min(tn_eff, max(512, ((n8 // 4 + 7) // 8) * 8))
    tn_eff = max(8, (tn_eff // 8) * 8)

    # Generation-aware VMEM budget; auto-shrink tn if the working set exceeds
    # it instead of clamping the limit (clamping does not make it fit).
    out_bytes = jnp.dtype(out_dtype).itemsize

    def _vmem_needed(t):
        return (2 * t * F * 4 + 2 * t * W_pad * out_bytes     # dbl-buf row tiles
                + 2 * (2 * F * F + F * D + D) * 4             # dbl-buf params
                + (4 << 20))                                   # scratch headroom

    try:
        vmem_cap = int(pltpu.get_tpu_info().vmem_capacity_bytes)
    except Exception:
        vmem_cap = 64 << 20          # conservative: v7x per-TC physical VMEM
    budget = max(16 << 20, (3 * vmem_cap) // 4)
    while _vmem_needed(tn_eff) > budget and tn_eff > 8:
        tn_eff = max(8, ((tn_eff // 2) // 8) * 8)
    vmem_limit = int(min(max(_vmem_needed(tn_eff), 16 << 20), budget))

    grid_n = pl.cdiv(n8, tn_eff)

    if bias is None:
        bias2d = jnp.zeros((1, D), jnp.float32)
    else:
        bias2d = bias.reshape(1, D).astype(jnp.float32)

    kernel = functools.partial(_fused_forward_kernel, d_model=D, n_features=F,
                               use_bf16=use_bf16, norm_eps=float(norm_eps))

    packed = pl.pallas_call(
        kernel,
        out_shape=jax.ShapeDtypeStruct((n8, W_pad), out_dtype),
        grid=(grid_n,),
        in_specs=[
            pl.BlockSpec((tn_eff, F), lambda i: (i, 0)),   # unsigned_precodes
            pl.BlockSpec((F, F), lambda i: (0, 0)),        # unsigned_precode_biases
            pl.BlockSpec((F, F), lambda i: (0, 0)),        # precode_biases_mask
            pl.BlockSpec((F, D), lambda i: (0, 0)),        # atoms
            pl.BlockSpec((1, D), lambda i: (0, 0)),        # bias
        ],
        out_specs=pl.BlockSpec((tn_eff, W_pad), lambda i: (i, 0)),
        compiler_params=pltpu.CompilerParams(
            dimension_semantics=("parallel",),
            vmem_limit_bytes=vmem_limit),
    )(up,
      unsigned_precode_biases.astype(jnp.float32),
      precode_biases_mask.astype(jnp.float32),
      atoms.astype(jnp.float32),
      bias2d)

    pred = packed[:N, :D]
    codes = packed[:N, D:D + F]
    return pred, codes, precodes_out


# ----------------------------------------------------------------------------
# Pure-JAX reference (mirrors the PyTorch module exactly) for verification.
# ----------------------------------------------------------------------------
def _reference_forward(unsigned_precodes, unsigned_precode_biases,
                       precode_biases_mask, atoms, bias):
    precodes = jnp.abs(unsigned_precodes)
    unnormed = jnp.abs(unsigned_precode_biases) * precode_biases_mask
    pb = unnormed / jnp.linalg.norm(unnormed, axis=-1, keepdims=True)
    codes = precodes + precodes @ pb
    pred = codes @ atoms
    if bias is not None:
        pred = pred + bias[None]
    return pred, codes, precodes


def _make_params(key, n_features, d_model):
    k_atoms, k_upb = jax.random.split(key, 2)
    # atoms ~ randn(F, D) / sqrt(D), then norm_atoms() row-normalizes (L2).
    atoms = jax.random.normal(k_atoms, (n_features, d_model),
                              jnp.float32) / math.sqrt(d_model)
    atoms = atoms / jnp.linalg.norm(atoms, axis=1, keepdims=True)
    # unsigned_precode_biases ~ randn(F, F) / (5 * sqrt(F))
    upb = jax.random.normal(k_upb, (n_features, n_features),
                            jnp.float32) / (5.0 * math.sqrt(n_features))
    # precode_biases_mask = ones - eye (non-trainable)
    mask = (jnp.ones((n_features, n_features), jnp.float32)
            - jnp.eye(n_features, dtype=jnp.float32))
    return atoms, upb, mask


if __name__ == "__main__":
    key = jax.random.PRNGKey(0)
    k_params, k_up, k_up2, k_params2, k_up3 = jax.random.split(key, 5)

    # ---- case 1: module-typical small shapes, single tile -------------------
    N, n_features, d_model = 16, 32, 64
    atoms, upb, mask = _make_params(k_params, n_features, d_model)
    unsigned_precodes = jax.random.normal(
        k_up, (N, n_features), jnp.float32) / math.sqrt(n_features)
    bias = jnp.zeros((d_model,), jnp.float32)   # module built with bias=True

    pred, codes, precodes = sparse_nnmf_forward(
        unsigned_precodes, upb, mask, atoms, bias)
    jax.block_until_ready((pred, codes, precodes))

    pred_r, codes_r, precodes_r = _reference_forward(
        unsigned_precodes, upb, mask, atoms, bias)
    assert pred.shape == (N, d_model)
    assert codes.shape == (N, n_features)
    assert precodes.shape == (N, n_features)
    assert jnp.allclose(pred, pred_r, atol=1e-5, rtol=1e-5)
    assert jnp.allclose(codes, codes_r, atol=1e-5, rtol=1e-5)
    assert jnp.allclose(precodes, precodes_r, atol=1e-6, rtol=1e-6)

    # ---- case 2: N not a multiple of 8 or the tile -> pad-to-8 + ragged tile
    N2 = 603
    up2 = jax.random.normal(k_up2, (N2, n_features),
                            jnp.float32) / math.sqrt(n_features)
    pred2, codes2, precodes2 = sparse_nnmf_forward(
        up2, upb, mask, atoms, bias, tn=256)
    jax.block_until_ready((pred2, codes2, precodes2))
    pred2_r, codes2_r, precodes2_r = _reference_forward(
        up2, upb, mask, atoms, bias)
    assert pred2.shape == (N2, d_model)
    assert jnp.allclose(pred2, pred2_r, atol=1e-5, rtol=1e-5)
    assert jnp.allclose(codes2, codes2_r, atol=1e-5, rtol=1e-5)
    assert jnp.allclose(precodes2, precodes2_r, atol=1e-6, rtol=1e-6)

    # ---- case 3: bf16-operand MXU path (f32 accumulate), loose tolerance ----
    pred_b, codes_b, precodes_b = sparse_nnmf_forward(
        unsigned_precodes, upb, mask, atoms, bias, use_bf16=True)
    jax.block_until_ready((pred_b, codes_b, precodes_b))
    assert jnp.allclose(pred_b, pred_r, atol=1e-1, rtol=1e-1)
    assert jnp.allclose(codes_b, codes_r, atol=1e-1, rtol=1e-1)
    assert jnp.allclose(precodes_b, precodes_r, atol=1e-6, rtol=1e-6)

    # ---- case 4: 128-aligned F/D -> direct aligned slice stores, bias=None ---
    N3, F3, D3 = 64, 128, 128
    atoms3, upb3, mask3 = _make_params(k_params2, F3, D3)
    up3 = jax.random.normal(k_up3, (N3, F3), jnp.float32) / math.sqrt(F3)
    pred3, codes3, precodes3 = sparse_nnmf_forward(
        up3, upb3, mask3, atoms3, None)
    jax.block_until_ready((pred3, codes3, precodes3))
    pred3_r, codes3_r, precodes3_r = _reference_forward(
        up3, upb3, mask3, atoms3, None)
    assert pred3.shape == (N3, D3)
    assert jnp.allclose(pred3, pred3_r, atol=1e-5, rtol=1e-5)
    assert jnp.allclose(codes3, codes3_r, atol=1e-5, rtol=1e-5)
    assert jnp.allclose(precodes3, precodes3_r, atol=1e-6, rtol=1e-6)

    print("KERNEL_OK")
</pallas_src>

<mosaic_0001>
module attributes {stable_mosaic.version = 11 : i64} {
  func.func @_fused_forward_kernel(%arg0: i32, %arg1: memref<16x32xf32, #tpu.memory_space<vmem>>, %arg2: memref<32x32xf32, #tpu.memory_space<vmem>>, %arg3: memref<32x32xf32, #tpu.memory_space<vmem>>, %arg4: memref<32x64xf32, #tpu.memory_space<vmem>>, %arg5: memref<1x64xf32, #tpu.memory_space<vmem>>, %arg6: memref<16x128xf32, #tpu.memory_space<vmem>>) attributes {dimension_semantics = [#tpu.dimension_semantics<parallel>], iteration_bounds = array<i64: 1>, scalar_prefetch = 0 : i64, scratch_operands = 0 : i64, tpu.core_type = #tpu.core_type<tc>, window_params = [{transform_indices = @transform_0, window_bounds = array<i64: 16, 32>}, {pipeline_mode = #tpu.pipeline_mode<synchronous>, transform_indices = @transform_1, window_bounds = array<i64: 32, 32>}, {pipeline_mode = #tpu.pipeline_mode<synchronous>, transform_indices = @transform_2, window_bounds = array<i64: 32, 32>}, {pipeline_mode = #tpu.pipeline_mode<synchronous>, transform_indices = @transform_3, window_bounds = array<i64: 32, 64>}, {pipeline_mode = #tpu.pipeline_mode<synchronous>, transform_indices = @transform_4, window_bounds = array<i64: 1, 64>}, {transform_indices = @transform_5, window_bounds = array<i64: 16, 128>}]} {
    %c0 = arith.constant 0 : index
    %c0_0 = arith.constant 0 : index
    %0 = vector.load %arg2[%c0, %c0_0] : memref<32x32xf32, #tpu.memory_space<vmem>>, vector<32x32xf32>
    %1 = math.absf %0 : vector<32x32xf32>
    %c0_1 = arith.constant 0 : index
    %c0_2 = arith.constant 0 : index
    %2 = vector.load %arg3[%c0_1, %c0_2] : memref<32x32xf32, #tpu.memory_space<vmem>>, vector<32x32xf32>
    %3 = arith.mulf %1, %2 : vector<32x32xf32>
    %4 = arith.mulf %3, %3 : vector<32x32xf32>
    %cst = arith.constant dense<0.000000e+00> : vector<32xf32>
    %5 = vector.multi_reduction <add>, %4, %cst [1] : vector<32x32xf32> to vector<32xf32>
    %6 = vector.shape_cast %5 : vector<32xf32> to vector<32x1xf32>
    %cst_3 = arith.constant 0.000000e+00 : f32
    %7 = vector.broadcast %cst_3 : f32 to vector<32x1xf32>
    %8 = arith.addf %6, %7 : vector<32x1xf32>
    %9 = math.rsqrt %8 : vector<32x1xf32>
    %10 = vector.broadcast %9 : vector<32x1xf32> to vector<32x32xf32>
    %11 = arith.mulf %3, %10 : vector<32x32xf32>
    %c0_4 = arith.constant 0 : index
    %c0_5 = arith.constant 0 : index
    %12 = vector.load %arg1[%c0_4, %c0_5] : memref<16x32xf32, #tpu.memory_space<vmem>>, vector<16x32xf32>
    %13 = math.absf %12 : vector<16x32xf32>
    %c0_6 = arith.constant 0 : index
    %c0_7 = arith.constant 0 : index
    %14 = vector.load %arg4[%c0_6, %c0_7] : memref<32x64xf32, #tpu.memory_space<vmem>>, vector<32x64xf32>
    %cst_8 = arith.constant dense<0.000000e+00> : vector<16x32xf32>
    %15 = tpu.matmul %13, %11, %cst_8 {dimension_numbers = #tpu.dot_dimension_numbers<[1], [0], [0], [1], [0, 0, 1, 1], [], []>} : vector<16x32xf32>, vector<32x32xf32>, vector<16x32xf32> -> vector<16x32xf32>
    %16 = arith.addf %13, %15 : vector<16x32xf32>
    %cst_9 = arith.constant dense<0.000000e+00> : vector<16x64xf32>
    %17 = tpu.matmul %16, %14, %cst_9 {dimension_numbers = #tpu.dot_dimension_numbers<[1], [0], [0], [1], [0, 0, 1, 1], [], []>} : vector<16x32xf32>, vector<32x64xf32>, vector<16x64xf32> -> vector<16x64xf32>
    %c0_10 = arith.constant 0 : index
    %c0_11 = arith.constant 0 : index
    %18 = vector.load %arg5[%c0_10, %c0_11] : memref<1x64xf32, #tpu.memory_space<vmem>>, vector<1x64xf32>
    %19 = vector.broadcast %18 : vector<1x64xf32> to vector<16x64xf32>
    %20 = arith.addf %17, %19 : vector<16x64xf32>
    %cst_12 = arith.constant 0.000000e+00 : f32
    %21 = vector.broadcast %cst_12 : f32 to vector<16x32xf32>
    %22 = tpu.concatenate %20, %16, %21 in 1 : vector<16x64xf32>, vector<16x32xf32>, vector<16x32xf32> -> vector<16x128xf32>
    %c0_13 = arith.constant 0 : index
    %c0_14 = arith.constant 0 : index
    %23 = vector.load %arg6[%c0_13, %c0_14] : memref<16x128xf32, #tpu.memory_space<vmem>>, vector<16x128xf32>
    tpu.vector_store %arg6[%c0_13, %c0_14], %22 {strides = array<i32>} : memref<16x128xf32, #tpu.memory_space<vmem>>, vector<16x128xf32>,
    return
  }
  func.func @transform_0(%arg0: i32) -> (i32, i32) {
    %c0_i32 = arith.constant 0 : i32
    %c0_i32_0 = arith.constant 0 : i32
    return %arg0, %c0_i32 : i32, i32
  }
  func.func @transform_1(%arg0: i32) -> (i32, i32) {
    %c0_i32 = arith.constant 0 : i32
    %c0_i32_0 = arith.constant 0 : i32
    %c0_i32_1 = arith.constant 0 : i32
    return %c0_i32, %c0_i32_0 : i32, i32
  }
  func.func @transform_2(%arg0: i32) -> (i32, i32) {
    %c0_i32 = arith.constant 0 : i32
    %c0_i32_0 = arith.constant 0 : i32
    %c0_i32_1 = arith.constant 0 : i32
    return %c0_i32, %c0_i32_0 : i32, i32
  }
  func.func @transform_3(%arg0: i32) -> (i32, i32) {
    %c0_i32 = arith.constant 0 : i32
    %c0_i32_0 = arith.constant 0 : i32
    %c0_i32_1 = arith.constant 0 : i32
    return %c0_i32, %c0_i32_0 : i32, i32
  }
  func.func @transform_4(%arg0: i32) -> (i32, i32) {
    %c0_i32 = arith.constant 0 : i32
    %c0_i32_0 = arith.constant 0 : i32
    %c0_i32_1 = arith.constant 0 : i32
    return %c0_i32, %c0_i32_0 : i32, i32
  }
  func.func @transform_5(%arg0: i32) -> (i32, i32) {
    %c0_i32 = arith.constant 0 : i32
    %c0_i32_0 = arith.constant 0 : i32
    return %arg0, %c0_i32 : i32, i32
  }
}

</mosaic_0001>

<llo_original>
// kernel: tpu_custom_call.1
$region0: #{tpu_custom_call.1}
  #allocation0 [shape = 'u32[]', space=smem, size = 0x4, offset = 0x4, fixed_abs, tag = 'smem constant byte address 0x4 - core index']
  #allocation1 [shape = 'u32[144,128]{1,0:T(1,128)}', space=vmem, size = 0x12000, scoped, tag = 'internal scratch']
  %s0 = inlined_call_operand.hbm [shape: f32[16,32], index: 0, kind: input, shape index: {}]
  %s1 = inlined_call_operand.hbm [shape: f32[32,32], index: 1, kind: input, shape index: {}]
  %s2 = inlined_call_operand.hbm [shape: f32[32,32], index: 2, kind: input, shape index: {}]
  %s3 = inlined_call_operand.hbm [shape: f32[32,64], index: 3, kind: input, shape index: {}]
  %s4 = inlined_call_operand.vmem [shape: f32[1,64], index: 4, kind: input, shape index: {}]
  %s5 = inlined_call_operand.hbm [shape: f32[16,128], index: 5, kind: output, shape index: {}]
  %s6 = sld [smem:[#allocation0]]
  $region46: #{tpu_custom_call.1} parent=0
    _
  %s8 = ssub.s32 1, %s6
  %s9 = scalar_select 0, %s8, %s6
  $region1: #{tpu_custom_call.1} parent=0
    #allocation2 [shape = 'u8[8192]{0}', space=vmem, size = 0x2000, scoped, tag = 'input window, operand 0, single buffered']
    #allocation3 [shape = 's32[1]{0}', space=sflag, size = 0x4, scoped, tag = 'scoped memory for tpu_custom_call.1']
    #allocation4 [shape = 's32[1]{0}', space=sflag, size = 0x4, scoped, tag = 'scoped memory for tpu_custom_call.1']
    #allocation5 [shape = 'u8[16384]{0}', space=vmem, size = 0x4000, scoped, tag = 'input window, operand 1, single buffered']
    #allocation6 [shape = 's32[1]{0}', space=sflag, size = 0x4, scoped, tag = 'scoped memory for tpu_custom_call.1']
    #allocation7 [shape = 'u8[16384]{0}', space=vmem, size = 0x4000, scoped, tag = 'input window, operand 2, single buffered']
    #allocation8 [shape = 'u8[16384]{0}', space=vmem, size = 0x4000, scoped, tag = 'input window, operand 3, single buffered']
    #allocation9 [shape = 's32[1]{0}', space=sflag, size = 0x4, scoped, tag = 'scoped memory for tpu_custom_call.1']
    #allocation10 [shape = 'u8[8192]{0}', space=vmem, size = 0x2000, scoped, tag = 'output window, operand 0, single buffered']
    %10 = vsyncpa [#allocation3], 0
    %11 = vsyncpa [#allocation6], 0
    %12 = vsyncpa [#allocation9], 0
    %13 = vsyncpa [#allocation4], 0
    // Predicated region
    $region2: #{tpu_custom_call.1} parent=1 // pred_check
      _
    $region3: #{tpu_custom_call.1} parent=1 // pred_check_branch
      %15 = sbr.rel (0) target = $region5
    $region4: #{tpu_custom_call.1} parent=1 // pred_region
      %s17 = ssub.s32 256, 256
      %18 = vsyncadd [#allocation3], %s17
      %s19 = sshll.u32 [#allocation2], 4
      %s20 = int_to_ptr.vmem [resolvable:$true] %s19
      %25 = dma.hbm_to_vmem [thread:$0]  %s0, 256, %s20, [#allocation3], 128, 128, 8
    $region5: #{tpu_custom_call.1} parent=1 // pred_fallthru
      _
    // Predicated region
    $region6: #{tpu_custom_call.1} parent=1 // pred_check
      _
    $region7: #{tpu_custom_call.1} parent=1 // pred_check_branch
      %27 = sbr.rel (0) target = $region9
    $region8: #{tpu_custom_call.1} parent=1 // pred_region
      %s29 = ssub.s32 512, 512
      %30 = vsyncadd [#allocation6], %s29
      %s31 = sshll.u32 [#allocation5], 4
      %s32 = int_to_ptr.vmem [resolvable:$true] %s31
      %37 = dma.hbm_to_vmem [thread:$0]  %s1, 512, %s32, [#allocation6], 128, 128, 8
    $region9: #{tpu_custom_call.1} parent=1 // pred_fallthru
      _
    // Predicated region
    $region10: #{tpu_custom_call.1} parent=1 // pred_check
      _
    $region11: #{tpu_custom_call.1} parent=1 // pred_check_branch
      %39 = sbr.rel (0) target = $region13
    $region12: #{tpu_custom_call.1} parent=1 // pred_region
      %s41 = ssub.s32 512, 512
      %42 = vsyncadd [#allocation6], %s41
      %s43 = sshll.u32 [#allocation7], 4
      %s44 = int_to_ptr.vmem [resolvable:$true] %s43
      %49 = dma.hbm_to_vmem [thread:$0]  %s2, 512, %s44, [#allocation6], 128, 128, 8
    $region13: #{tpu_custom_call.1} parent=1 // pred_fallthru
      _
    // Predicated region
    $region14: #{tpu_custom_call.1} parent=1 // pred_check
      _
    $region15: #{tpu_custom_call.1} parent=1 // pred_check_branch
      %51 = sbr.rel (0) target = $region17
    $region16: #{tpu_custom_call.1} parent=1 // pred_region
      %s53 = ssub.s32 512, 512
      %54 = vsyncadd [#allocation9], %s53
      %s55 = sshll.u32 [#allocation8], 4
      %s56 = int_to_ptr.vmem [resolvable:$true] %s55
      %61 = dma.hbm_to_vmem [thread:$0]  %s3, 512, %s56, [#allocation9], 128, 128, 8
    $region17: #{tpu_custom_call.1} parent=1 // pred_fallthru
      _
    // Predicated region
    $region18: #{tpu_custom_call.1} parent=1 // pred_check
      _
    $region19: #{tpu_custom_call.1} parent=1 // pred_check_branch
      %63 = sbr.rel (0) target = $region21
    $region20: #{tpu_custom_call.1} parent=1 // pred_region
      _
    $region21: #{tpu_custom_call.1} parent=1 // pred_fallthru
      _
    // Predicated region
    $region22: #{tpu_custom_call.1} parent=1 // pred_check
      _
    $region23: #{tpu_custom_call.1} parent=1 // pred_check_branch
      %65 = sbr.rel (0) target = $region25
    $region24: #{tpu_custom_call.1} parent=1 // pred_region
      %66 = dma.done [#allocation3], 256
    $region25: #{tpu_custom_call.1} parent=1 // pred_fallthru
      _
    // Predicated region
    $region26: #{tpu_custom_call.1} parent=1 // pred_check
      _
    $region27: #{tpu_custom_call.1} parent=1 // pred_check_branch
      %68 = sbr.rel (0) target = $region29
    $region28: #{tpu_custom_call.1} parent=1 // pred_region
      %69 = dma.done [#allocation6], 512
    $region29: #{tpu_custom_call.1} parent=1 // pred_fallthru
      _
    // Predicated region
    $region30: #{tpu_custom_call.1} parent=1 // pred_check
      _
    $region31: #{tpu_custom_call.1} parent=1 // pred_check_branch
      %71 = sbr.rel (0) target = $region33
    $region32: #{tpu_custom_call.1} parent=1 // pred_region
      %72 = dma.done [#allocation6], 512
    $region33: #{tpu_custom_call.1} parent=1 // pred_fallthru
      _
    // Predicated region
    $region34: #{tpu_custom_call.1} parent=1 // pred_check
      _
    $region35: #{tpu_custom_call.1} parent=1 // pred_check_branch
      %74 = sbr.rel (0) target = $region37
    $region36: #{tpu_custom_call.1} parent=1 // pred_region
      %75 = dma.done [#allocation9], 512
    $region37: #{tpu_custom_call.1} parent=1 // pred_fallthru
      _
    %v76 = vld [vmem:[#allocation5] sm:$0xff]
    %v77 = vld [vmem:[#allocation5 + $0x8] sm:$0xff]
    %v78 = vld [vmem:[#allocation5 + $0x10] sm:$0xff]
    %v79 = vld [vmem:[#allocation5 + $0x18] sm:$0xff]
    %v80 = vand.u32 2147483647, %v76
    %v81 = vand.u32 2147483647, %v77
    %v82 = vand.u32 2147483647, %v78
    %v83 = vand.u32 2147483647, %v79
    %v84 = vld [vmem:[#allocation7] sm:$0xff]
    %v85 = vld [vmem:[#allocation7 + $0x8] sm:$0xff]
    %v86 = vld [vmem:[#allocation7 + $0x10] sm:$0xff]
    %v87 = vld [vmem:[#allocation7 + $0x18] sm:$0xff]
    %v88 = vmul.f32 %v80, %v84
    %v89 = vmul.f32 %v81, %v85
    %v90 = vmul.f32 %v82, %v86
    %v91 = vmul.f32 %v83, %v87
    %v92 = vmul.f32 %v88, %v88
    %v93 = vmul.f32 %v89, %v89
    %v94 = vmul.f32 %v90, %v90
    %v95 = vmul.f32 %v91, %v91
    %vm96 = vcmask 261120
    %v97 = vsel %vm96, %v92, 0.0
    %98 = vadd.xlane.f32.xlu0 %v97
    %v99 = vpop.xlane.xlu0 %98
    %v100 = vsel %vm96, %v93, 0.0
    %101 = vadd.xlane.f32.xlu0 %v100
    %v102 = vpop.xlane.xlu0 %101
    %v103 = vsel %vm96, %v94, 0.0
    %104 = vadd.xlane.f32.xlu0 %v103
    %v105 = vpop.xlane.xlu0 %104
    %v106 = vsel %vm96, %v95, 0.0
    %107 = vadd.xlane.f32.xlu0 %v106
    %v108 = vpop.xlane.xlu0 %107
    %v109 = vadd.f32 %v99, 0.0
    %v110 = vadd.f32 %v102, 0.0
    %v111 = vadd.f32 %v105, 0.0
    %v112 = vadd.f32 %v108, 0.0
    %v113 = vrsqrt.pop %v109
    %v114 = vrsqrt.pop %v110
    %v115 = vrsqrt.pop %v111
    %v116 = vrsqrt.pop %v112
    %v117 = vmul.f32 %v88, %v113
    %v118 = vmul.f32 %v89, %v114
    %v119 = vmul.f32 %v90, %v115
    %v120 = vmul.f32 %v91, %v116
    %v121 = vld [vmem:[#allocation2] sm:$0xff]
    %v122 = vld [vmem:[#allocation2 + $0x8] sm:$0xff]
    %v123 = vand.u32 2147483647, %v121
    %v124 = vand.u32 2147483647, %v122
    %v125 = vld [vmem:[#allocation8] sm:$0xff]
    %v126 = vld [vmem:[#allocation8 + $0x8] sm:$0xff]
    %v127 = vld [vmem:[#allocation8 + $0x10] sm:$0xff]
    %v128 = vld [vmem:[#allocation8 + $0x18] sm:$0xff]
    %v130 = vsel %vm96, %v123, 0
    %v133 = vsel %vm96, %v124, 0
    %135 = vmatprep.subr.mxu0 0.0
    %136 = vmatpush1.msra.mxu0 0.0
    %137 = vmatprep.subr.mxu0 0.0
    %138 = vmatpush1.msra.mxu0 0.0
    %139 = vmatprep.subr.mxu0 0.0
    %140 = vmatpush1.msra.mxu0 0.0
    %141 = vmatprep.subr.mxu0 0.0
    %142 = vmatpush1.msra.mxu0 0.0
    %143 = vmatprep.subr.mxu0 0.0
    %144 = vmatpush1.msra.mxu0 0.0
    %145 = vmatprep.subr.mxu0 0.0
    %146 = vmatpush1.msra.mxu0 0.0
    %147 = vmatprep.subr.mxu0 0.0
    %148 = vmatpush1.msra.mxu0 0.0
    %149 = vmatprep.subr.mxu0 0.0
    %150 = vmatpush1.msra.mxu0 0.0
    %151 = vmatprep.subr.mxu0 0.0
    %152 = vmatpush1.msra.mxu0 0.0
    %153 = vmatprep.subr.mxu0 0.0
    %154 = vmatpush1.msra.mxu0 0.0
    %155 = vmatprep.subr.mxu0 0.0
    %156 = vmatpush1.msra.mxu0 0.0
    %157 = vmatprep.subr.mxu0 0.0
    %158 = vmatpush1.msra.mxu0 0.0
    %159 = vmatprep.subr.mxu0 0.0
    %160 = vmatpush1.msra.mxu0 %v120
    %161 = vmatprep.subr.mxu0 0.0
    %162 = vmatpush1.msra.mxu0 %v119
    %163 = vmatprep.subr.mxu0 0.0
    %164 = vmatpush1.msra.mxu0 %v118
    %165 = vmatprep.subr.mxu0 0.0
    %166 = vmatpush1.msra.mxu0 %v117
    %167 = vmatprep.subr.mxu0 0.0
    %168 = vmatpush2.msra.mxu0 0.0
    %169 = vmatprep.subr.mxu0 0.0
    %170 = vmatpush2.msra.mxu0 0.0
    %171 = vmatprep.subr.mxu0 0.0
    %172 = vmatpush2.msra.mxu0 0.0
    %173 = vmatprep.subr.mxu0 0.0
    %174 = vmatpush2.msra.mxu0 0.0
    %175 = vmatprep.subr.mxu0 0.0
    %176 = vmatpush2.msra.mxu0 0.0
    %177 = vmatprep.subr.mxu0 0.0
    %178 = vmatpush2.msra.mxu0 0.0
    %179 = vmatprep.subr.mxu0 0.0
    %180 = vmatpush2.msra.mxu0 0.0
    %181 = vmatprep.subr.mxu0 0.0
    %182 = vmatpush2.msra.mxu0 0.0
    %183 = vmatprep.subr.mxu0 0.0
    %184 = vmatpush2.msra.mxu0 0.0
    %185 = vmatprep.subr.mxu0 0.0
    %186 = vmatpush2.msra.mxu0 0.0
    %187 = vmatprep.subr.mxu0 0.0
    %188 = vmatpush2.msra.mxu0 0.0
    %189 = vmatprep.subr.mxu0 0.0
    %190 = vmatpush2.msra.mxu0 0.0
    %191 = vmatprep.subr.mxu0 0.0
    %192 = vmatpush2.msra.mxu0 0.0
    %193 = vmatprep.subr.mxu0 0.0
    %194 = vmatpush2.msra.mxu0 0.0
    %195 = vmatprep.subr.mxu0 0.0
    %196 = vmatpush2.msra.mxu0 0.0
    %197 = vmatprep.subr.mxu0 0.0
    %198 = vmatpush2.msra.mxu0 0.0
    %199 = vmatprep.mubr.f32.mxu0 0.0
    %200 = vmatmul.mubr.f32.gmra.mxu0 %v130
    %v201 = vpop.f32.mrf.mxu0
    %v202 = vadd.f32 0.0, %v201
    %v203 = vpop.f32.mrf.mxu0
    %204 = vmatprep.mubr.f32.mxu0 0.0
    %205 = vmatmul.mubr.f32.gmra.mxu0 %v133
    %v206 = vpop.f32.mrf.mxu0
    %v207 = vadd.f32 0.0, %v206
    %v208 = vpop.f32.mrf.mxu0
    %209 = vdwg.mxu0
    %v210 = vadd.f32 %v123, %v202
    %v211 = vadd.f32 %v124, %v207
    %v212 = vld [vmem:[%s4] sm:$0x1]
    %v214 = vlaneseq
    %v215 = vshrl.u32 %v214, 7
    %v216 = vsub.s32 0, %v215
    %v217 = vrot.slane %v212, %v216
    %v220 = vsel %vm96, %v210, 0
    %v223 = vsel %vm96, %v211, 0
    %225 = vmatprep.subr.mxu0 0.0
    %226 = vmatpush1.msra.mxu0 0.0
    %227 = vmatprep.subr.mxu0 0.0
    %228 = vmatpush1.msra.mxu0 0.0
    %229 = vmatprep.subr.mxu0 0.0
    %230 = vmatpush1.msra.mxu0 0.0
    %231 = vmatprep.subr.mxu0 0.0
    %232 = vmatpush1.msra.mxu0 0.0
    %233 = vmatprep.subr.mxu0 0.0
    %234 = vmatpush1.msra.mxu0 0.0
    %235 = vmatprep.subr.mxu0 0.0
    %236 = vmatpush1.msra.mxu0 0.0
    %237 = vmatprep.subr.mxu0 0.0
    %238 = vmatpush1.msra.mxu0 0.0
    %239 = vmatprep.subr.mxu0 0.0
    %240 = vmatpush1.msra.mxu0 0.0
    %241 = vmatprep.subr.mxu0 0.0
    %242 = vmatpush1.msra.mxu0 0.0
    %243 = vmatprep.subr.mxu0 0.0
    %244 = vmatpush1.msra.mxu0 0.0
    %245 = vmatprep.subr.mxu0 0.0
    %246 = vmatpush1.msra.mxu0 0.0
    %247 = vmatprep.subr.mxu0 0.0
    %248 = vmatpush1.msra.mxu0 0.0
    %249 = vmatprep.subr.mxu0 0.0
    %250 = vmatpush1.msra.mxu0 %v128
    %251 = vmatprep.subr.mxu0 0.0
    %252 = vmatpush1.msra.mxu0 %v127
    %253 = vmatprep.subr.mxu0 0.0
    %254 = vmatpush1.msra.mxu0 %v126
    %255 = vmatprep.subr.mxu0 0.0
    %256 = vmatpush1.msra.mxu0 %v125
    %257 = vmatprep.subr.mxu0 0.0
    %258 = vmatpush2.msra.mxu0 0.0
    %259 = vmatprep.subr.mxu0 0.0
    %260 = vmatpush2.msra.mxu0 0.0
    %261 = vmatprep.subr.mxu0 0.0
    %262 = vmatpush2.msra.mxu0 0.0
    %263 = vmatprep.subr.mxu0 0.0
    %264 = vmatpush2.msra.mxu0 0.0
    %265 = vmatprep.subr.mxu0 0.0
    %266 = vmatpush2.msra.mxu0 0.0
    %267 = vmatprep.subr.mxu0 0.0
    %268 = vmatpush2.msra.mxu0 0.0
    %269 = vmatprep.subr.mxu0 0.0
    %270 = vmatpush2.msra.mxu0 0.0
    %271 = vmatprep.subr.mxu0 0.0
    %272 = vmatpush2.msra.mxu0 0.0
    %273 = vmatprep.subr.mxu0 0.0
    %274 = vmatpush2.msra.mxu0 0.0
    %275 = vmatprep.subr.mxu0 0.0
    %276 = vmatpush2.msra.mxu0 0.0
    %277 = vmatprep.subr.mxu0 0.0
    %278 = vmatpush2.msra.mxu0 0.0
    %279 = vmatprep.subr.mxu0 0.0
    %280 = vmatpush2.msra.mxu0 0.0
    %281 = vmatprep.subr.mxu0 0.0
    %282 = vmatpush2.msra.mxu0 0.0
    %283 = vmatprep.subr.mxu0 0.0
    %284 = vmatpush2.msra.mxu0 0.0
    %285 = vmatprep.subr.mxu0 0.0
    %286 = vmatpush2.msra.mxu0 0.0
    %287 = vmatprep.subr.mxu0 0.0
    %288 = vmatpush2.msra.mxu0 0.0
    %289 = vmatprep.mubr.f32.mxu0 0.0
    %290 = vmatmul.mubr.f32.gmra.mxu0 %v220
    %v291 = vpop.f32.mrf.mxu0
    %v292 = vadd.f32 %v217, %v291
    %v293 = vpop.f32.mrf.mxu0
    %294 = vmatprep.mubr.f32.mxu0 0.0
    %295 = vmatmul.mubr.f32.gmra.mxu0 %v223
    %v296 = vpop.f32.mrf.mxu0
    %v297 = vadd.f32 %v217, %v296
    %v298 = vpop.f32.mrf.mxu0
    %299 = vdwg.mxu0
    %300 = vrot.lane.b32.xlu0 %v210, 64
    %v301 = vpop.permute.xlu0 %300
    %302 = vrot.lane.b32.xlu0 %v211, 64
    %v303 = vpop.permute.xlu0 %302
    %vm306 = vcmask 523264
    %v307 = vsel %vm306, %v292, %v301
    %v308 = vsel %vm306, %v297, %v303
    %vm309 = vcmask 785408
    %v310 = vsel %vm309, %v307, 0.0
    %v311 = vsel %vm309, %v308, 0.0
    %312 = vst [vmem:[#allocation10] sm:$0xff] %v310
    %313 = vst [vmem:[#allocation10 + $0x8] sm:$0xff] %v311
    // Predicated region
    $region38: #{tpu_custom_call.1} parent=1 // pred_check
      _
    $region39: #{tpu_custom_call.1} parent=1 // pred_check_branch
      %315 = sbr.rel (0) target = $region41
    $region40: #{tpu_custom_call.1} parent=1 // pred_region
      %s317 = ssub.s32 256, 256
      %318 = vsyncadd [#allocation4], %s317
      %s319 = sshll.u32 [#allocation10], 4
      %s320 = int_to_ptr.vmem [resolvable:$true] %s319
      %325 = dma.vmem_to_hbm [thread:$0]  %s320, 256, %s5, [#allocation4], 128, 128, 8
    $region41: #{tpu_custom_call.1} parent=1 // pred_fallthru
      _
    // Predicated region
    $region42: #{tpu_custom_call.1} parent=1 // pred_check
      _
    $region43: #{tpu_custom_call.1} parent=1 // pred_check_branch
      %327 = sbr.rel (0) target = $region45
    $region44: #{tpu_custom_call.1} parent=1 // pred_region
      %328 = dma.done [#allocation4], 256
    $region45: #{tpu_custom_call.1} parent=1 // pred_fallthru
      _
    %329 = vsyncpa [#allocation3], 1
    %330 = vsyncpa [#allocation6], 1
    %331 = vsyncpa [#allocation9], 1
    %332 = vsyncpa [#allocation4], 1

</llo_original>
